<compile_context>
chip_gen: v6e
topology: v6e:2x2x1
jax: 0.10.0
libtpu: 0.0.40
codegen_flags: <defaults>
</compile_context>

<pallas_src>
import functools

import jax
import jax.numpy as jnp
from jax import lax
from jax.experimental import pallas as pl
from jax.experimental.pallas import tpu as pltpu


# --------------------------------------------------------------------------- #
# Kernel
# --------------------------------------------------------------------------- #
def _patch_norm_kernel(fg_ref, bg_ref, mask_ref, par_ref, out_ref, *, eps):
    """One (batch, channel-block) tile: rows = channels, lanes = flat H*W.

    mask_ref is (1, HW) when the mask is shared across channels (sublane
    broadcast in-register) or (cb, HW) when it is per-channel.
    """
    f32 = jnp.float32
    fg = fg_ref[...].astype(f32)           # (cb, HW)
    bg = bg_ref[...].astype(f32)           # (cb, HW)
    m = mask_ref[...].astype(f32)          # (1, HW) or (cb, HW)
    if m.shape[0] != fg.shape[0]:
        m = jnp.broadcast_to(m, fg.shape)  # once per tile (sublane broadcast)
    mb = 1.0 - m

    par = par_ref[...]                     # (cb, 8) f32 folded per-channel params
    A = par[:, 0:1]                        # w0*fg_var + w1*patched_fg_var
    Bc = par[:, 1:2]                       # w0*fg_var + w1*patched_fg_var*grid_w
    Dc = par[:, 2:3]                       # w0*fg_bias + w1*patched_fg_bias
    p_bg_var = par[:, 3:4]                 # bg_var parameter
    p_bg_bias = par[:, 4:5]                # bg_bias parameter

    # ---- background masked stats (per channel row); recip/rsqrt on the EUP ----
    n_bg = jnp.sum(mb, axis=-1, keepdims=True)
    inv_n_bg = pl.reciprocal(n_bg + eps, approx=True)
    mean_bg = jnp.sum(bg * mb, axis=-1, keepdims=True) * inv_n_bg
    d_bg = (bg - mean_bg) * mb
    var_bg = jnp.sum(d_bg * d_bg, axis=-1, keepdims=True) * inv_n_bg
    std_bg = jnp.sqrt(var_bg + eps)
    inv_std_bg = lax.rsqrt(var_bg + eps)

    # ---- foreground masked stats (per channel row) ----
    n_fg = jnp.sum(m, axis=-1, keepdims=True)
    inv_n_fg = pl.reciprocal(n_fg + eps, approx=True)
    mean_fg = jnp.sum(fg * m, axis=-1, keepdims=True) * inv_n_fg
    d_fg = (fg - mean_fg) * m
    var_fg = jnp.sum(d_fg * d_fg, axis=-1, keepdims=True) * inv_n_fg
    inv_std_fg = lax.rsqrt(var_fg + eps)

    # ---- fold normalize + patch-normalize + blend into per-row affine coeffs --
    # fg_result = (fg - fg_mean)/fg_std * bg_std * A + bg_mean*Bc + Dc
    k1 = A * std_bg * inv_std_fg
    k0 = mean_bg * Bc + Dc - mean_fg * k1
    # bg_normalized = (bg - bg_mean)/bg_std * p_bg_var + p_bg_bias
    g1 = p_bg_var * inv_std_bg
    g0 = p_bg_bias - mean_bg * g1

    out = m * (fg * k1 + k0) + mb * (bg * g1 + g0)
    out_ref[...] = out.astype(out_ref.dtype)


# --------------------------------------------------------------------------- #
# Channel-block sizing: full C (small channel counts) or multiple of 8,
# bounded by a conservative VMEM budget (f32 sizing, double-buffered I/O +
# in-register f32 temporaries).
# --------------------------------------------------------------------------- #
def _choose_channel_block(C, hw, vmem_budget_bytes):
    bytes_per_row = (2 * 3 + 6) * hw * 4      # 2x(fg+bg+out) DMA bufs + ~6 f32 temps
    max_rows = max(1, vmem_budget_bytes // bytes_per_row)
    if C <= 8 or C <= max_rows:
        return C, C                           # single full-extent channel block
    padded = ((C + 7) // 8) * 8
    cb = max(8, (min(max_rows, padded) // 8) * 8)
    while cb > 8 and padded % cb != 0:
        cb -= 8
    if padded % cb != 0:
        cb = 8
    return cb, padded


# --------------------------------------------------------------------------- #
# Wrapper
# --------------------------------------------------------------------------- #
def patch_normalizer_forward(fg, bg, mask, *, weights, fg_var, fg_bias,
                             patched_fg_var, patched_fg_bias, bg_var, bg_bias,
                             grid_weights, eps=1e-7, grid_count=1,
                             vmem_budget_bytes=16 * 1024 * 1024):
    if grid_count != 1:
        # TODO(synk): general grid_count>1 patch tiling not implemented in-kernel.
        raise NotImplementedError("Pallas PatchNormalizer supports grid_count == 1 only")

    B, C, H, W = fg.shape
    HW = H * W
    out_dtype = fg.dtype

    Cm = mask.shape[1]
    assert mask.shape[0] == B and mask.shape[2:] == (H, W) and Cm in (1, C), \
        "mask must be (B,1,H,W) or (B,C,H,W)"

    # Contiguous-dim merges: free views, no data movement.
    fg3 = fg.reshape(B, C, HW)
    bg3 = bg.reshape(B, C, HW)
    m3 = mask.reshape(B, Cm, HW)

    # Fold per-channel parameters once (tiny (C, 8) table, lane dim = 8 = full).
    w = weights.astype(jnp.float32)
    w0, w1 = w[0], w[1]
    fgv = fg_var.astype(jnp.float32).reshape(C)
    fgb = fg_bias.astype(jnp.float32).reshape(C)
    pfgv = patched_fg_var.astype(jnp.float32).reshape(C)
    pfgb = patched_fg_bias.astype(jnp.float32).reshape(C)
    bgv = bg_var.astype(jnp.float32).reshape(C)
    bgb = bg_bias.astype(jnp.float32).reshape(C)
    gw = grid_weights.astype(jnp.float32).reshape(C)

    A = w0 * fgv + w1 * pfgv
    Bc = w0 * fgv + w1 * pfgv * gw
    Dc = w0 * fgb + w1 * pfgb
    zeros = jnp.zeros_like(A)
    par = jnp.stack([A, Bc, Dc, bgv, bgb, zeros, zeros, zeros], axis=-1)  # (C, 8)

    cb, C_pad = _choose_channel_block(C, HW, vmem_budget_bytes)
    if C_pad != C:
        pad = C_pad - C
        fg3 = jnp.pad(fg3, ((0, 0), (0, pad), (0, 0)))
        bg3 = jnp.pad(bg3, ((0, 0), (0, pad), (0, 0)))
        par = jnp.pad(par, ((0, pad), (0, 0)))
        if Cm == C:
            m3 = jnp.pad(m3, ((0, 0), (0, pad), (0, 0)))

    grid = (B, C_pad // cb)

    if Cm == 1:
        # Shared mask: indexed by batch only, never materialized per-channel.
        mask_spec = pl.BlockSpec((None, 1, HW), lambda b, c: (b, 0, 0))
    else:
        mask_spec = pl.BlockSpec((None, cb, HW), lambda b, c: (b, c, 0))

    kernel = functools.partial(_patch_norm_kernel, eps=float(eps))

    out3 = pl.pallas_call(
        kernel,
        out_shape=jax.ShapeDtypeStruct((B, C_pad, HW), out_dtype),
        grid_spec=pltpu.PrefetchScalarGridSpec(
            num_scalar_prefetch=0,
            grid=grid,
            in_specs=[
                pl.BlockSpec((None, cb, HW), lambda b, c: (b, c, 0)),   # fg
                pl.BlockSpec((None, cb, HW), lambda b, c: (b, c, 0)),   # bg
                mask_spec,                                              # mask
                pl.BlockSpec((cb, 8), lambda b, c: (c, 0)),             # params
            ],
            out_specs=pl.BlockSpec((None, cb, HW), lambda b, c: (b, c, 0)),
        ),
        compiler_params=pltpu.CompilerParams(
            # Both axes independent -> megacore sharding on v7x; free elsewhere.
            dimension_semantics=("parallel", "parallel"),
            # Headroom under v7x's 64 MiB physical VMEM (v5e/v6e have 128 MiB).
            vmem_limit_bytes=48 * 1024 * 1024,
        ),
    )(fg3, bg3, m3, par)

    if C_pad != C:
        out3 = out3[:, :C]
    return out3.reshape(B, C, H, W)


# --------------------------------------------------------------------------- #
# Pure-JAX reference (direct translation of the PyTorch forward, grid_count=1)
# --------------------------------------------------------------------------- #
def patch_normalizer_reference(fg, bg, mask, *, weights, fg_var, fg_bias,
                               patched_fg_var, patched_fg_bias, bg_var, bg_bias,
                               grid_weights, eps=1e-7):
    mask = jnp.broadcast_to(mask.astype(jnp.float32), fg.shape)

    def get_mean_std(img, m):
        s = jnp.sum(img * m, axis=(2, 3))
        n = jnp.sum(m, axis=(2, 3))
        mean = (s / (n + eps))[:, :, None, None]
        var = jnp.sum(((img - mean) * m) ** 2, axis=(2, 3)) / (n + eps)
        return mean, jnp.sqrt(var[:, :, None, None] + eps)

    bg_mean, bg_std = get_mean_std(bg, 1.0 - mask)
    bg_normalized = (bg - bg_mean) / bg_std * bg_var + bg_bias
    fg_mean, fg_std = get_mean_std(fg, mask)
    unscaled = (fg - fg_mean) / fg_std
    # grid_count == 1: single patch == full image -> patch mean == bg_mean.
    mean_patched_back = bg_mean * grid_weights
    normalized = unscaled * bg_std + bg_mean
    patch_normalized = unscaled * bg_std + mean_patched_back
    fg_normalized = normalized * fg_var + fg_bias
    fg_patch_normalized = patch_normalized * patched_fg_var + patched_fg_bias
    fg_result = weights[0] * fg_normalized + weights[1] * fg_patch_normalized
    return fg_result * mask + bg_normalized * (1.0 - mask)


# --------------------------------------------------------------------------- #
# Demo / self-check
# --------------------------------------------------------------------------- #
if __name__ == "__main__":
    key = jax.random.PRNGKey(0)
    # (B, C, H, W, per_channel_mask)
    cases = [(2, 4, 16, 16, False), (2, 3, 20, 12, False), (2, 4, 16, 16, True)]
    for (B, C, H, W, per_channel_mask) in cases:
        key, kfg, kbg, kmask, kp = jax.random.split(key, 5)
        fg = jax.random.normal(kfg, (B, C, H, W), dtype=jnp.float32)
        bg = jax.random.normal(kbg, (B, C, H, W), dtype=jnp.float32)
        m_shape = (B, C, H, W) if per_channel_mask else (B, 1, H, W)
        mask = (jax.random.uniform(kmask, m_shape) > 0.5).astype(jnp.float32)

        pk = jax.random.split(kp, 7)
        params = dict(
            weights=jnp.array([0.6, 0.4], jnp.float32),
            fg_var=0.8 + 0.4 * jax.random.uniform(pk[0], (1, C, 1, 1), dtype=jnp.float32),
            fg_bias=0.1 * jax.random.normal(pk[1], (1, C, 1, 1), dtype=jnp.float32),
            patched_fg_var=0.8 + 0.4 * jax.random.uniform(pk[2], (1, C, 1, 1), dtype=jnp.float32),
            patched_fg_bias=0.1 * jax.random.normal(pk[3], (1, C, 1, 1), dtype=jnp.float32),
            bg_var=0.8 + 0.4 * jax.random.uniform(pk[4], (1, C, 1, 1), dtype=jnp.float32),
            bg_bias=0.1 * jax.random.normal(pk[5], (1, C, 1, 1), dtype=jnp.float32),
            grid_weights=(jnp.ones((1, C, 1, 1), jnp.float32) / C)
                         * (0.9 + 0.2 * jax.random.uniform(pk[6], (1, C, 1, 1), dtype=jnp.float32)),
        )

        out = patch_normalizer_forward(fg, bg, mask, eps=1e-7, grid_count=1, **params)
        out = jax.block_until_ready(out)

        ref = patch_normalizer_reference(fg, bg, mask, eps=1e-7, **params)
        assert out.shape == fg.shape and out.dtype == fg.dtype
        assert bool(jnp.isfinite(out).all()), "non-finite output"
        max_err = float(jnp.max(jnp.abs(out - ref)))
        assert max_err < 2e-2, f"mismatch vs reference: max abs err = {max_err}"

    print("KERNEL_OK")
</pallas_src>

<mosaic_0001>
module attributes {stable_mosaic.version = 11 : i64} {
  func.func @_patch_norm_kernel(%arg0: i32, %arg1: i32, %arg2: memref<1x4x256xf32, #tpu.memory_space<vmem>>, %arg3: memref<1x4x256xf32, #tpu.memory_space<vmem>>, %arg4: memref<1x1x256xf32, #tpu.memory_space<vmem>>, %arg5: memref<4x8xf32, #tpu.memory_space<vmem>>, %arg6: memref<1x4x256xf32, #tpu.memory_space<vmem>>) attributes {dimension_semantics = [#tpu.dimension_semantics<parallel>, #tpu.dimension_semantics<parallel>], iteration_bounds = array<i64: 2, 1>, scalar_prefetch = 0 : i64, scratch_operands = 0 : i64, tpu.core_type = #tpu.core_type<tc>, window_params = [{transform_indices = @transform_0, window_bounds = array<i64: 1, 4, 256>}, {transform_indices = @transform_1, window_bounds = array<i64: 1, 4, 256>}, {transform_indices = @transform_2, window_bounds = array<i64: 1, 1, 256>}, {transform_indices = @transform_3, window_bounds = array<i64: 4, 8>}, {transform_indices = @transform_4, window_bounds = array<i64: 1, 4, 256>}]} {
    %c0 = arith.constant 0 : index
    %c0_0 = arith.constant 0 : index
    %c0_1 = arith.constant 0 : index
    %0 = vector.load %arg2[%c0, %c0_0, %c0_1] : memref<1x4x256xf32, #tpu.memory_space<vmem>>, vector<1x4x256xf32>
    %1 = vector.shape_cast %0 : vector<1x4x256xf32> to vector<4x256xf32>
    %c0_2 = arith.constant 0 : index
    %c0_3 = arith.constant 0 : index
    %c0_4 = arith.constant 0 : index
    %2 = vector.load %arg3[%c0_2, %c0_3, %c0_4] : memref<1x4x256xf32, #tpu.memory_space<vmem>>, vector<1x4x256xf32>
    %3 = vector.shape_cast %2 : vector<1x4x256xf32> to vector<4x256xf32>
    %c0_5 = arith.constant 0 : index
    %c0_6 = arith.constant 0 : index
    %c0_7 = arith.constant 0 : index
    %4 = vector.load %arg4[%c0_5, %c0_6, %c0_7] : memref<1x1x256xf32, #tpu.memory_space<vmem>>, vector<1x1x256xf32>
    %5 = vector.shape_cast %4 : vector<1x1x256xf32> to vector<1x256xf32>
    %6 = vector.shape_cast %5 : vector<1x256xf32> to vector<1x256xf32>
    %7 = vector.broadcast %6 : vector<1x256xf32> to vector<4x256xf32>
    %cst = arith.constant 1.000000e+00 : f32
    %8 = vector.broadcast %cst : f32 to vector<4x256xf32>
    %9 = arith.subf %8, %7 : vector<4x256xf32>
    %c0_8 = arith.constant 0 : index
    %c0_9 = arith.constant 0 : index
    %10 = vector.load %arg5[%c0_8, %c0_9] : memref<4x8xf32, #tpu.memory_space<vmem>>, vector<4x8xf32>
    %11 = vector.extract_strided_slice %10 {offsets = [0, 0], sizes = [4, 1], strides = [1, 1]} : vector<4x8xf32> to vector<4x1xf32>
    %12 = vector.extract_strided_slice %10 {offsets = [0, 1], sizes = [4, 1], strides = [1, 1]} : vector<4x8xf32> to vector<4x1xf32>
    %13 = vector.extract_strided_slice %10 {offsets = [0, 2], sizes = [4, 1], strides = [1, 1]} : vector<4x8xf32> to vector<4x1xf32>
    %14 = vector.extract_strided_slice %10 {offsets = [0, 3], sizes = [4, 1], strides = [1, 1]} : vector<4x8xf32> to vector<4x1xf32>
    %15 = vector.extract_strided_slice %10 {offsets = [0, 4], sizes = [4, 1], strides = [1, 1]} : vector<4x8xf32> to vector<4x1xf32>
    %cst_10 = arith.constant dense<0.000000e+00> : vector<4xf32>
    %16 = vector.multi_reduction <add>, %9, %cst_10 [1] : vector<4x256xf32> to vector<4xf32>
    %17 = vector.shape_cast %16 : vector<4xf32> to vector<4x1xf32>
    %cst_11 = arith.constant 1.000000e-07 : f32
    %18 = vector.broadcast %cst_11 : f32 to vector<4x1xf32>
    %19 = arith.addf %17, %18 : vector<4x1xf32>
    %20 = tpu.reciprocal %19 {approx = true} : vector<4x1xf32> -> vector<4x1xf32>
    %21 = arith.mulf %3, %9 : vector<4x256xf32>
    %cst_12 = arith.constant dense<0.000000e+00> : vector<4xf32>
    %22 = vector.multi_reduction <add>, %21, %cst_12 [1] : vector<4x256xf32> to vector<4xf32>
    %23 = vector.shape_cast %22 : vector<4xf32> to vector<4x1xf32>
    %24 = arith.mulf %23, %20 : vector<4x1xf32>
    %25 = vector.broadcast %24 : vector<4x1xf32> to vector<4x256xf32>
    %26 = arith.subf %3, %25 : vector<4x256xf32>
    %27 = arith.mulf %26, %9 : vector<4x256xf32>
    %28 = arith.mulf %27, %27 : vector<4x256xf32>
    %cst_13 = arith.constant dense<0.000000e+00> : vector<4xf32>
    %29 = vector.multi_reduction <add>, %28, %cst_13 [1] : vector<4x256xf32> to vector<4xf32>
    %30 = vector.shape_cast %29 : vector<4xf32> to vector<4x1xf32>
    %31 = arith.mulf %30, %20 : vector<4x1xf32>
    %cst_14 = arith.constant 1.000000e-07 : f32
    %32 = vector.broadcast %cst_14 : f32 to vector<4x1xf32>
    %33 = arith.addf %31, %32 : vector<4x1xf32>
    %34 = math.sqrt %33 : vector<4x1xf32>
    %cst_15 = arith.constant 1.000000e-07 : f32
    %35 = vector.broadcast %cst_15 : f32 to vector<4x1xf32>
    %36 = arith.addf %31, %35 : vector<4x1xf32>
    %37 = math.rsqrt %36 : vector<4x1xf32>
    %cst_16 = arith.constant dense<0.000000e+00> : vector<4xf32>
    %38 = vector.multi_reduction <add>, %7, %cst_16 [1] : vector<4x256xf32> to vector<4xf32>
    %39 = vector.shape_cast %38 : vector<4xf32> to vector<4x1xf32>
    %cst_17 = arith.constant 1.000000e-07 : f32
    %40 = vector.broadcast %cst_17 : f32 to vector<4x1xf32>
    %41 = arith.addf %39, %40 : vector<4x1xf32>
    %42 = tpu.reciprocal %41 {approx = true} : vector<4x1xf32> -> vector<4x1xf32>
    %43 = arith.mulf %1, %7 : vector<4x256xf32>
    %cst_18 = arith.constant dense<0.000000e+00> : vector<4xf32>
    %44 = vector.multi_reduction <add>, %43, %cst_18 [1] : vector<4x256xf32> to vector<4xf32>
    %45 = vector.shape_cast %44 : vector<4xf32> to vector<4x1xf32>
    %46 = arith.mulf %45, %42 : vector<4x1xf32>
    %47 = vector.broadcast %46 : vector<4x1xf32> to vector<4x256xf32>
    %48 = arith.subf %1, %47 : vector<4x256xf32>
    %49 = arith.mulf %48, %7 : vector<4x256xf32>
    %50 = arith.mulf %49, %49 : vector<4x256xf32>
    %cst_19 = arith.constant dense<0.000000e+00> : vector<4xf32>
    %51 = vector.multi_reduction <add>, %50, %cst_19 [1] : vector<4x256xf32> to vector<4xf32>
    %52 = vector.shape_cast %51 : vector<4xf32> to vector<4x1xf32>
    %53 = arith.mulf %52, %42 : vector<4x1xf32>
    %cst_20 = arith.constant 1.000000e-07 : f32
    %54 = vector.broadcast %cst_20 : f32 to vector<4x1xf32>
    %55 = arith.addf %53, %54 : vector<4x1xf32>
    %56 = math.rsqrt %55 : vector<4x1xf32>
    %57 = arith.mulf %11, %34 : vector<4x1xf32>
    %58 = arith.mulf %57, %56 : vector<4x1xf32>
    %59 = arith.mulf %24, %12 : vector<4x1xf32>
    %60 = arith.addf %59, %13 : vector<4x1xf32>
    %61 = arith.mulf %46, %58 : vector<4x1xf32>
    %62 = arith.subf %60, %61 : vector<4x1xf32>
    %63 = arith.mulf %14, %37 : vector<4x1xf32>
    %64 = arith.mulf %24, %63 : vector<4x1xf32>
    %65 = arith.subf %15, %64 : vector<4x1xf32>
    %66 = vector.broadcast %58 : vector<4x1xf32> to vector<4x256xf32>
    %67 = arith.mulf %1, %66 : vector<4x256xf32>
    %68 = vector.broadcast %62 : vector<4x1xf32> to vector<4x256xf32>
    %69 = arith.addf %67, %68 : vector<4x256xf32>
    %70 = arith.mulf %7, %69 : vector<4x256xf32>
    %71 = vector.broadcast %63 : vector<4x1xf32> to vector<4x256xf32>
    %72 = arith.mulf %3, %71 : vector<4x256xf32>
    %73 = vector.broadcast %65 : vector<4x1xf32> to vector<4x256xf32>
    %74 = arith.addf %72, %73 : vector<4x256xf32>
    %75 = arith.mulf %9, %74 : vector<4x256xf32>
    %76 = arith.addf %70, %75 : vector<4x256xf32>
    %c0_21 = arith.constant 0 : index
    %c0_22 = arith.constant 0 : index
    %c0_23 = arith.constant 0 : index
    %77 = vector.load %arg6[%c0_21, %c0_22, %c0_23] : memref<1x4x256xf32, #tpu.memory_space<vmem>>, vector<1x4x256xf32>
    %78 = vector.shape_cast %77 : vector<1x4x256xf32> to vector<4x256xf32>
    %79 = vector.shape_cast %76 : vector<4x256xf32> to vector<1x4x256xf32>
    tpu.vector_store %arg6[%c0_21, %c0_22, %c0_23], %79 {strides = array<i32>} : memref<1x4x256xf32, #tpu.memory_space<vmem>>, vector<1x4x256xf32>,
    return
  }
  func.func @transform_0(%arg0: i32, %arg1: i32) -> (i32, i32, i32) {
    %c0_i32 = arith.constant 0 : i32
    %c0_i32_0 = arith.constant 0 : i32
    return %arg0, %arg1, %c0_i32 : i32, i32, i32
  }
  func.func @transform_1(%arg0: i32, %arg1: i32) -> (i32, i32, i32) {
    %c0_i32 = arith.constant 0 : i32
    %c0_i32_0 = arith.constant 0 : i32
    return %arg0, %arg1, %c0_i32 : i32, i32, i32
  }
  func.func @transform_2(%arg0: i32, %arg1: i32) -> (i32, i32, i32) {
    %c0_i32 = arith.constant 0 : i32
    %c0_i32_0 = arith.constant 0 : i32
    %c0_i32_1 = arith.constant 0 : i32
    return %arg0, %c0_i32, %c0_i32_0 : i32, i32, i32
  }
  func.func @transform_3(%arg0: i32, %arg1: i32) -> (i32, i32) {
    %c0_i32 = arith.constant 0 : i32
    %c0_i32_0 = arith.constant 0 : i32
    return %arg1, %c0_i32 : i32, i32
  }
  func.func @transform_4(%arg0: i32, %arg1: i32) -> (i32, i32, i32) {
    %c0_i32 = arith.constant 0 : i32
    %c0_i32_0 = arith.constant 0 : i32
    return %arg0, %arg1, %c0_i32 : i32, i32, i32
  }
}

</mosaic_0001>

<llo_original>
// kernel: tpu_custom_call.1
$region0: #{tpu_custom_call.1}
  #allocation0 [shape = 'u32[]', space=smem, size = 0x4, offset = 0x4, fixed_abs, tag = 'smem constant byte address 0x4 - core index']
  #allocation1 [shape = 'u32[144,128]{1,0:T(1,128)}', space=vmem, size = 0x12000, scoped, tag = 'internal scratch']
  %s0 = inlined_call_operand.hbm [shape: f32[2,4,256], index: 0, kind: input, shape index: {}]
  %s1 = inlined_call_operand.hbm [shape: f32[2,4,256], index: 1, kind: input, shape index: {}]
  %s2 = inlined_call_operand.hbm [shape: f32[2,1,256], index: 2, kind: input, shape index: {}]
  %s3 = inlined_call_operand.vmem [shape: f32[4,8], index: 3, kind: input, shape index: {}]
  %s4 = inlined_call_operand.hbm [shape: f32[2,4,256], index: 4, kind: output, shape index: {}]
  %s5 = sld [smem:[#allocation0]]
  $region61: #{tpu_custom_call.1} parent=0
    _
  %s7 = ssub.s32 1, %s5
  %s8 = scalar_select 0, %s7, %s5
  $region1: #{tpu_custom_call.1} parent=0
    #allocation2 [shape = 'u8[8192]{0}', space=vmem, size = 0x2000, scoped, tag = 'input window, operand 0']
    #allocation3 [shape = 's32[2]{0}', space=sflag, size = 0x8, scoped, tag = 'scoped memory for tpu_custom_call.1']
    #allocation4 [shape = 's32[2]{0}', space=sflag, size = 0x8, scoped, tag = 'scoped memory for tpu_custom_call.1']
    #allocation5 [shape = 'u8[8192]{0}', space=vmem, size = 0x2000, scoped, tag = 'input window, operand 1']
    #allocation6 [shape = 's32[2]{0}', space=sflag, size = 0x8, scoped, tag = 'scoped memory for tpu_custom_call.1']
    #allocation7 [shape = 'u8[2048]{0}', space=vmem, size = 0x800, scoped, tag = 'input window, operand 2']
    #allocation8 [shape = 'u8[8192]{0}', space=vmem, size = 0x2000, scoped, tag = 'output window, operand 0']
    %9 = vsyncpa [#allocation3], 0
    %s10 = scalar_lea.sflag [#allocation3], 1
    %11 = vsyncpa %s10, 0
    %12 = vsyncpa [#allocation6], 0
    %s13 = scalar_lea.sflag [#allocation6], 1
    %14 = vsyncpa %s13, 0
    %15 = vsyncpa [#allocation4], 0
    %s16 = scalar_lea.sflag [#allocation4], 1
    %17 = vsyncpa %s16, 0
    loop: start=0, step=1, limit=4
    $region2: #{tpu_custom_call.1} parent=1 // loop_pre_header
      _
    $region3: #{tpu_custom_call.1} parent=1 // loop_header
      %s19 = sphi 0, %s23
      %p20 = scmp.ge.s32.totalorder %s19, 4
      %s26 = sphi 0, %s38
      %s27 = sphi 0, %s34
      %s28 = sphi 0, %s26
      %s29 = sphi 0, %s27
      %s30 = sphi 0, %s28
      %s31 = sphi 0, %s29
      %s43 = sphi 0, %s45
      %s46 = sphi 0, %s43
      %s47 = sphi 0, %s46
      %s63 = sphi 0, %s47
      %s71 = sphi 0, %s73
      %s74 = sphi 0, %s71
      %s75 = sphi 0, %s74
      %s91 = sphi 0, %s75
      %s97 = sphi 0, %s99
      %s100 = sphi 0, %s97
      %s101 = sphi 0, %s100
      %s117 = sphi 0, %s101
      %s123 = sphi 0, %s125
      %s126 = sphi 0, %s123
      %s127 = sphi 0, %s126
      %s143 = sphi 0, %s127
      %s151 = sphi 0, %s153
      %s154 = sphi 0, %s151
      %s155 = sphi 0, %s154
      %s171 = sphi 0, %s155
    $region4: #{tpu_custom_call.1} parent=1 // loop_header_branch
      %22 = sbr.rel (%p20) target = $region8
    $region5: #{tpu_custom_call.1} parent=1 // loop_body
      %s24 = ssub.s32 %s19, 1
      %s25 = ssub.s32 %s19, 2
      %s32 = sadd.s32 1, %s27
      %p33 = scmp.ge.s32.totalorder %s32, 1
      %s34 = scalar_select %p33, 0, %s32
      %s35 = sadd.s32 1, %s26
      %s36 = scalar_select %p33, %s35, %s26
      %p37 = scmp.ge.s32.totalorder %s36, 2
      %s38 = scalar_select %p37, 0, %s36
      %s39 = ssub.s32 %s26, %s38
      %s40 = ssub.s32 %s27, %s34
      %s41 = sor.u32 %s39, %s40
      %p42 = scmp.eq.s32.totalorder %s41, 0
      %s44 = sadd.s32 %s43, 1
      %s45 = scalar_select %p42, %s43, %s44
      %p48 = pneg %p42
      %p49 = scmp.eq.s32.totalorder %s19, 1
      %p50 = por %p48, %p49
      %p51 = scmp.ne.s32.totalorder %s43, %s46
      %p52 = scmp.eq.s32.totalorder %s19, 0
      %p53 = por %p51, %p52
      %p54 = scmp.ne.s32.totalorder %s43, %s46
      %p55 = scmp.eq.s32.totalorder %s24, 1
      %p56 = por %p54, %p55
      %p57 = scmp.ne.s32.totalorder %s46, %s47
      %p58 = scmp.eq.s32.totalorder %s24, 0
      %p59 = por %p57, %p58
      %p60 = scmp.ne.s32.totalorder %s46, %s47
      %p61 = scmp.eq.s32.totalorder %s25, 1
      %p62 = por %p60, %p61
      %p64 = scmp.ne.s32.totalorder %s47, %s63
      %p65 = scmp.eq.s32.totalorder %s25, 0
      %p66 = por %p64, %p65
      %s67 = ssub.s32 %s26, %s38
      %s68 = ssub.s32 %s27, %s34
      %s69 = sor.u32 %s67, %s68
      %p70 = scmp.eq.s32.totalorder %s69, 0
      %s72 = sadd.s32 %s71, 1
      %s73 = scalar_select %p70, %s71, %s72
      %p76 = pneg %p70
      %p77 = scmp.eq.s32.totalorder %s19, 1
      %p78 = por %p76, %p77
      %p79 = scmp.ne.s32.totalorder %s71, %s74
      %p80 = scmp.eq.s32.totalorder %s19, 0
      %p81 = por %p79, %p80
      %p82 = scmp.ne.s32.totalorder %s71, %s74
      %p83 = scmp.eq.s32.totalorder %s24, 1
      %p84 = por %p82, %p83
      %p85 = scmp.ne.s32.totalorder %s74, %s75
      %p86 = scmp.eq.s32.totalorder %s24, 0
      %p87 = por %p85, %p86
      %p88 = scmp.ne.s32.totalorder %s74, %s75
      %p89 = scmp.eq.s32.totalorder %s25, 1
      %p90 = por %p88, %p89
      %p92 = scmp.ne.s32.totalorder %s75, %s91
      %p93 = scmp.eq.s32.totalorder %s25, 0
      %p94 = por %p92, %p93
      %s95 = ssub.s32 %s26, %s38
      %p96 = scmp.eq.s32.totalorder %s95, 0
      %s98 = sadd.s32 %s97, 1
      %s99 = scalar_select %p96, %s97, %s98
      %p102 = pneg %p96
      %p103 = scmp.eq.s32.totalorder %s19, 1
      %p104 = por %p102, %p103
      %p105 = scmp.ne.s32.totalorder %s97, %s100
      %p106 = scmp.eq.s32.totalorder %s19, 0
      %p107 = por %p105, %p106
      %p108 = scmp.ne.s32.totalorder %s97, %s100
      %p109 = scmp.eq.s32.totalorder %s24, 1
      %p110 = por %p108, %p109
      %p111 = scmp.ne.s32.totalorder %s100, %s101
      %p112 = scmp.eq.s32.totalorder %s24, 0
      %p113 = por %p111, %p112
      %p114 = scmp.ne.s32.totalorder %s100, %s101
      %p115 = scmp.eq.s32.totalorder %s25, 1
      %p116 = por %p114, %p115
      %p118 = scmp.ne.s32.totalorder %s101, %s117
      %p119 = scmp.eq.s32.totalorder %s25, 0
      %p120 = por %p118, %p119
      %s121 = ssub.s32 %s27, %s34
      %p122 = scmp.eq.s32.totalorder %s121, 0
      %s124 = sadd.s32 %s123, 1
      %s125 = scalar_select %p122, %s123, %s124
      %p128 = pneg %p122
      %p129 = scmp.eq.s32.totalorder %s19, 1
      %p130 = por %p128, %p129
      %p131 = scmp.ne.s32.totalorder %s123, %s126
      %p132 = scmp.eq.s32.totalorder %s19, 0
      %p133 = por %p131, %p132
      %p134 = scmp.ne.s32.totalorder %s123, %s126
      %p135 = scmp.eq.s32.totalorder %s24, 1
      %p136 = por %p134, %p135
      %p137 = scmp.ne.s32.totalorder %s126, %s127
      %p138 = scmp.eq.s32.totalorder %s24, 0
      %p139 = por %p137, %p138
      %p140 = scmp.ne.s32.totalorder %s126, %s127
      %p141 = scmp.eq.s32.totalorder %s25, 1
      %p142 = por %p140, %p141
      %p144 = scmp.ne.s32.totalorder %s127, %s143
      %p145 = scmp.eq.s32.totalorder %s25, 0
      %p146 = por %p144, %p145
      %s147 = ssub.s32 %s26, %s38
      %s148 = ssub.s32 %s27, %s34
      %s149 = sor.u32 %s147, %s148
      %p150 = scmp.eq.s32.totalorder %s149, 0
      %s152 = sadd.s32 %s151, 1
      %s153 = scalar_select %p150, %s151, %s152
      %p156 = pneg %p150
      %p157 = scmp.eq.s32.totalorder %s19, 1
      %p158 = por %p156, %p157
      %p159 = scmp.ne.s32.totalorder %s151, %s154
      %p160 = scmp.eq.s32.totalorder %s19, 0
      %p161 = por %p159, %p160
      %p162 = scmp.ne.s32.totalorder %s151, %s154
      %p163 = scmp.eq.s32.totalorder %s24, 1
      %p164 = por %p162, %p163
      %p165 = scmp.ne.s32.totalorder %s154, %s155
      %p166 = scmp.eq.s32.totalorder %s24, 0
      %p167 = por %p165, %p166
      %p168 = scmp.ne.s32.totalorder %s154, %s155
      %p169 = scmp.eq.s32.totalorder %s25, 1
      %p170 = por %p168, %p169
      %p172 = scmp.ne.s32.totalorder %s155, %s171
      %p173 = scmp.eq.s32.totalorder %s25, 0
      %p174 = por %p172, %p173
      %p175 = scmp.le.s32.totalorder 1, %s19
      %p176 = scmp.lt.s32.totalorder %s19, 3
      %p177 = pnand %p175, %p176
      %p178 = pneg %p177
      // Predicated region
      $region9: #{tpu_custom_call.1} parent=5 // pred_check
        _
      $region10: #{tpu_custom_call.1} parent=5 // pred_check_branch
        %180 = sbr.rel (%p177) target = $region12
      $region11: #{tpu_custom_call.1} parent=5 // pred_region
        %s181 = ssub.s32 %s19, 1
        // Predicated region
        $region13: #{tpu_custom_call.1} parent=11 // pred_check
          %p182 = pneg %p139
        $region14: #{tpu_custom_call.1} parent=11 // pred_check_branch
          %184 = sbr.rel (%p182) target = $region16
        $region15: #{tpu_custom_call.1} parent=11 // pred_region
          %p185 = scmp.lt.s32.totalorder %s29, 0
          %s186 = scalar_select %p185, %s29, 0
          %s187 = smul.addr %s186, 4
          %s188 = scalar_lea.vmem %s3, %s187
        $region16: #{tpu_custom_call.1} parent=11 // pred_fallthru
          _
      $region12: #{tpu_custom_call.1} parent=5 // pred_fallthru
        _
      %p189 = scmp.lt.s32.totalorder %s19, 2
      // Predicated region
      $region17: #{tpu_custom_call.1} parent=5 // pred_check
        %p190 = pneg %p189
      $region18: #{tpu_custom_call.1} parent=5 // pred_check_branch
        %192 = sbr.rel (%p190) target = $region20
      $region19: #{tpu_custom_call.1} parent=5 // pred_region
        // Predicated region
        $region21: #{tpu_custom_call.1} parent=19 // pred_check
          %p193 = pneg %p53
        $region22: #{tpu_custom_call.1} parent=19 // pred_check_branch
          %195 = sbr.rel (%p193) target = $region24
        $region23: #{tpu_custom_call.1} parent=19 // pred_region
          %s196 = sand.u32 %s43, 1
          %s197 = scalar_lea.sflag [#allocation3], %s196
          %s198 = sand.u32 %s43, 1
          %s199 = smul.addr %s198, 8
          %s200 = scalar_lea.vmem [#allocation2], %s199
          %s202 = ssub.s32 128, 128
          %203 = vsyncadd %s197, %s202
          %s204 = smul.addr %s27, 2
          %s205 = smul.addr %s26, 2
          %s206 = sadd.s32 %s204, %s205
          %s207 = smul.addr %s206, 64
          %s208 = scalar_lea.hbm %s0, %s207
          %s210 = sshll.u32 %s200, 4
          %s211 = int_to_ptr.vmem [resolvable:$true] %s210
          %213 = dma.hbm_to_vmem [thread:$0]  %s208, 128, %s211, %s197
        $region24: #{tpu_custom_call.1} parent=19 // pred_fallthru
          _
        // Predicated region
        $region25: #{tpu_custom_call.1} parent=19 // pred_check
          %p214 = pneg %p81
        $region26: #{tpu_custom_call.1} parent=19 // pred_check_branch
          %216 = sbr.rel (%p214) target = $region28
        $region27: #{tpu_custom_call.1} parent=19 // pred_region
          %s217 = sand.u32 %s19, 1
          %s218 = scalar_lea.sflag [#allocation6], %s217
          %s219 = sand.u32 %s71, 1
          %s220 = smul.addr %s219, 8
          %s221 = scalar_lea.vmem [#allocation5], %s220
          %s223 = ssub.s32 128, 128
          %224 = vsyncadd %s218, %s223
          %s225 = smul.addr %s27, 2
          %s226 = smul.addr %s26, 2
          %s227 = sadd.s32 %s225, %s226
          %s228 = smul.addr %s227, 64
          %s229 = scalar_lea.hbm %s1, %s228
          %s231 = sshll.u32 %s221, 4
          %s232 = int_to_ptr.vmem [resolvable:$true] %s231
          %234 = dma.hbm_to_vmem [thread:$0]  %s229, 128, %s232, %s218
        $region28: #{tpu_custom_call.1} parent=19 // pred_fallthru
          _
        // Predicated region
        $region29: #{tpu_custom_call.1} parent=19 // pred_check
          %p235 = pneg %p107
        $region30: #{tpu_custom_call.1} parent=19 // pred_check_branch
          %237 = sbr.rel (%p235) target = $region32
        $region31: #{tpu_custom_call.1} parent=19 // pred_region
          %s238 = sand.u32 %s19, 1
          %s239 = scalar_lea.sflag [#allocation6], %s238
          %s240 = sand.u32 %s97, 1
          %s241 = smul.addr %s240, 2
          %s242 = scalar_lea.vmem [#allocation7], %s241
          %s244 = ssub.s32 32, 32
          %245 = vsyncadd %s239, %s244
          %s246 = smul.addr %s26, 2
          %s247 = smul.addr %s246, 16
          %s248 = scalar_lea.hbm %s2, %s247
          %s250 = sshll.u32 %s242, 4
          %s251 = int_to_ptr.vmem [resolvable:$true] %s250
          %253 = dma.hbm_to_vmem [thread:$0]  %s248, 32, %s251, %s239
        $region32: #{tpu_custom_call.1} parent=19 // pred_fallthru
          _
      $region20: #{tpu_custom_call.1} parent=5 // pred_fallthru
        _
      %p254 = scmp.le.s32.totalorder 1, %s19
      %p255 = scmp.lt.s32.totalorder %s19, 3
      %p256 = pnand %p254, %p255
      %p257 = pneg %p256
      // Predicated region
      $region33: #{tpu_custom_call.1} parent=5 // pred_check
        _
      $region34: #{tpu_custom_call.1} parent=5 // pred_check_branch
        %259 = sbr.rel (%p256) target = $region36
      $region35: #{tpu_custom_call.1} parent=5 // pred_region
        %s260 = ssub.s32 %s19, 1
        %s261 = sand.u32 %s46, 1
        %s262 = scalar_lea.sflag [#allocation3], %s261
        %s263 = sand.u32 %s46, 1
        %s264 = smul.addr %s263, 8
        %s265 = scalar_lea.vmem [#allocation2], %s264
        // Predicated region
        $region37: #{tpu_custom_call.1} parent=35 // pred_check
          %p266 = pneg %p59
        $region38: #{tpu_custom_call.1} parent=35 // pred_check_branch
          %268 = sbr.rel (%p266) target = $region40
        $region39: #{tpu_custom_call.1} parent=35 // pred_region
          %269 = dma.done %s262, 128
        $region40: #{tpu_custom_call.1} parent=35 // pred_fallthru
          _
        %s270 = sand.u32 %s24, 1
        %s271 = scalar_lea.sflag [#allocation6], %s270
        %s272 = sand.u32 %s74, 1
        %s273 = smul.addr %s272, 8
        %s274 = scalar_lea.vmem [#allocation5], %s273
        // Predicated region
        $region41: #{tpu_custom_call.1} parent=35 // pred_check
          %p275 = pneg %p87
        $region42: #{tpu_custom_call.1} parent=35 // pred_check_branch
          %277 = sbr.rel (%p275) target = $region44
        $region43: #{tpu_custom_call.1} parent=35 // pred_region
          %278 = dma.done %s271, 128
        $region44: #{tpu_custom_call.1} parent=35 // pred_fallthru
          _
        %s279 = sand.u32 %s24, 1
        %s280 = scalar_lea.sflag [#allocation6], %s279
        %s281 = sand.u32 %s100, 1
        %s282 = smul.addr %s281, 2
        %s283 = scalar_lea.vmem [#allocation7], %s282
        // Predicated region
        $region45: #{tpu_custom_call.1} parent=35 // pred_check
          %p284 = pneg %p113
        $region46: #{tpu_custom_call.1} parent=35 // pred_check_branch
          %286 = sbr.rel (%p284) target = $region48
        $region47: #{tpu_custom_call.1} parent=35 // pred_region
          %287 = dma.done %s280, 32
        $region48: #{tpu_custom_call.1} parent=35 // pred_fallthru
          _
        %s288 = sand.u32 %s46, 1
        %s289 = scalar_lea.sflag [#allocation3], %s288
        %s290 = sand.u32 %s46, 1
        %s291 = smul.addr %s290, 8
        %s292 = scalar_lea.vmem [#allocation2], %s291
        %p293 = pneg %p59
        %p294 = pneg %p56
        %s295 = sand.u32 %s24, 1
        %s296 = scalar_lea.sflag [#allocation6], %s295
        %s297 = sand.u32 %s74, 1
        %s298 = smul.addr %s297, 8
        %s299 = scalar_lea.vmem [#allocation5], %s298
        %p300 = pneg %p87
        %p301 = pneg %p84
        %s302 = sand.u32 %s24, 1
        %s303 = scalar_lea.sflag [#allocation6], %s302
        %s304 = sand.u32 %s100, 1
        %s305 = smul.addr %s304, 2
        %s306 = scalar_lea.vmem [#allocation7], %s305
        %p307 = pneg %p113
        %p308 = pneg %p110
        %p309 = scmp.lt.s32.totalorder %s29, 0
        %s310 = scalar_select %p309, %s29, 0
        %s311 = smul.addr %s310, 4
        %s312 = scalar_lea.vmem %s3, %s311
        %p313 = pneg %p139
        %p314 = pneg %p136
        %p315 = pneg %p167
        %p316 = pneg %p164
        %s317 = sand.u32 %s154, 1
        %s318 = scalar_lea.sflag [#allocation4], %s317
        %s319 = sand.u32 %s154, 1
        %s320 = smul.addr %s319, 8
        %s321 = scalar_lea.vmem [#allocation8], %s320
        %p322 = scmp.lt.s32.totalorder %s29, 0
        %s323 = scalar_select %p322, %s29, 0
        %s324 = smul.addr %s323, 4
        %s325 = scalar_lea.vmem %s3, %s324
        %v326 = vld [vmem:[%s265] sm:$0xff]
        %v327 = vld [vmem:[%s274] sm:$0xff]
        %v328 = vld [vmem:[%s283] sm:$0x3]
        %v330 = vlaneseq
        %v331 = vshrl.u32 %v330, 7
        %v332 = vsub.s32 0, %v331
        %v333 = vrot.slane %v328, %v332
        %v334 = vlaneseq
        %v335 = vshrl.u32 %v334, 7
        %v336 = vsub.s32 1, %v335
        %v337 = vrot.slane %v328, %v336
        %v340 = vsub.f32 1.0, %v333
        %v341 = vsub.f32 1.0, %v337
        %v342 = vld [vmem:[%s325] sm:$0xf]
        %v343 = vadd.f32 %v340, %v341
        %344 = vadd.xlane.f32.xlu0 %v343
        %v345 = vpop.xlane.xlu0 %344
        %v346 = vadd.f32 %v345, 1e-07
        %v347 = vrcp.pop %v346
        %v350 = vcombine.low %v340, %v341
        %v352 = vmul.f32 %v327, %v350
        %v354 = vcombine.high %v352, %v352
        %vm356 = vcmask 1043456
        %v357 = vsel %vm356, %v352, 0.0
        %v358 = vsel %vm356, %v354, 0.0
        %v359 = vadd.f32 %v357, %v358
        %360 = vadd.xlane.f32.xlu0 %v359
        %v361 = vpop.xlane.xlu0 %360
        %v362 = vmul.f32 %v361, %v347
        %v365 = vunpack.c.l.s4 839922192
        %v366 = vunpack.c.0.s8 %v365
        %v367 = vlaneseq
        %v368 = vshrl.u32 %v367, 7
        %v369 = vsub.s32 %v366, %v368
        %v370 = vrot.slane %v362, %v369
        %v372 = vsub.f32 %v327, %v370
        %v373 = vmul.f32 %v372, %v350
        %v374 = vmul.f32 %v373, %v373
        %v376 = vcombine.high %v374, %v374
        %v378 = vsel %vm356, %v374, 0.0
        %v379 = vsel %vm356, %v376, 0.0
        %v380 = vadd.f32 %v378, %v379
        %381 = vadd.xlane.f32.xlu0 %v380
        %v382 = vpop.xlane.xlu0 %381
        %v383 = vmul.f32 %v382, %v347
        %v384 = vadd.f32 %v383, 1e-07
        %v385 = vrsqrt.pop %v384
        %v386 = vmul.f32 %v384, %v385
        %vm387 = vcmp.eq.f32.partialorder %v384, inf
        %v388 = vsel %vm387, %v384, %v386
        %vm389 = vcmp.eq.f32.partialorder %v384, 0.0
        %v390 = vand.u32 %v384, 2147483648
        %v391 = vsel %vm389, %v390, %v388
        %v392 = vrsqrt.pop %v384
        %v393 = vadd.f32 %v333, %v337
        %394 = vadd.xlane.f32.xlu0 %v393
        %v395 = vpop.xlane.xlu0 %394
        %v396 = vadd.f32 %v395, 1e-07
        %v397 = vrcp.pop %v396
        %v398 = vcombine.low %v333, %v337
        %v400 = vmul.f32 %v326, %v398
        %v402 = vcombine.high %v400, %v400
        %v404 = vsel %vm356, %v400, 0.0
        %v405 = vsel %vm356, %v402, 0.0
        %v406 = vadd.f32 %v404, %v405
        %407 = vadd.xlane.f32.xlu0 %v406
        %v408 = vpop.xlane.xlu0 %407
        %v409 = vmul.f32 %v408, %v397
        %v412 = vunpack.c.l.s4 839922192
        %v413 = vunpack.c.0.s8 %v412
        %v414 = vlaneseq
        %v415 = vshrl.u32 %v414, 7
        %v416 = vsub.s32 %v413, %v415
        %v417 = vrot.slane %v409, %v416
        %v419 = vsub.f32 %v326, %v417
        %v420 = vmul.f32 %v419, %v398
        %v421 = vmul.f32 %v420, %v420
        %v423 = vcombine.high %v421, %v421
        %v425 = vsel %vm356, %v421, 0.0
        %v426 = vsel %vm356, %v423, 0.0
        %v427 = vadd.f32 %v425, %v426
        %428 = vadd.xlane.f32.xlu0 %v427
        %v429 = vpop.xlane.xlu0 %428
        %v430 = vmul.f32 %v429, %v397
        %v431 = vadd.f32 %v430, 1e-07
        %v432 = vrsqrt.pop %v431
        %v433 = vmul.f32 %v342, %v391
        %v434 = vmul.f32 %v433, %v432
        %v435 = vmul.f32 %v362, %v342
        %437 = vrot.lane.b32.xlu0 %v342, 127
        %v438 = vpop.permute.xlu0 %437
        %v440 = vadd.f32 %v435, %v438
        %v441 = vmul.f32 %v409, %v434
        %443 = vrot.lane.b32.xlu0 %v441, 1
        %v444 = vpop.permute.xlu0 %443
        %v446 = vsub.f32 %v440, %v444
        %v447 = vmul.f32 %v342, %v392
        %v448 = vmul.f32 %v362, %v447
        %450 = vrot.lane.b32.xlu0 %v448, 1
        %v451 = vpop.permute.xlu0 %450
        %v453 = vsub.f32 %v342, %v451
        %455 = vset.pattern.permute.xlu0 0
        %456 = vperm.xlu0 %455, %v434
        %v457 = vpop.permute.xlu0 %456
        %v459 = vunpack.c.l.s4 839922192
        %v460 = vunpack.c.0.s8 %v459
        %v461 = vlaneseq
        %v462 = vshrl.u32 %v461, 7
        %v463 = vsub.s32 %v460, %v462
        %v464 = vrot.slane %v457, %v463
        %v466 = vmul.f32 %v326, %v464
        %468 = vset.pattern.permute.xlu0 1
        %469 = vperm.xlu0 %468, %v446
        %v470 = vpop.permute.xlu0 %469
        %v472 = vunpack.c.l.s4 839922192
        %v473 = vunpack.c.0.s8 %v472
        %v474 = vlaneseq
        %v475 = vshrl.u32 %v474, 7
        %v476 = vsub.s32 %v473, %v475
        %v477 = vrot.slane %v470, %v476
        %v479 = vadd.f32 %v466, %v477
        %v481 = vcombine.high %v479, %v479
        %v483 = vmul.f32 %v333, %v479
        %v484 = vmul.f32 %v337, %v481
        %486 = vset.pattern.permute.xlu0 3
        %487 = vperm.xlu0 %486, %v447
        %v488 = vpop.permute.xlu0 %487
        %v490 = vunpack.c.l.s4 839922192
        %v491 = vunpack.c.0.s8 %v490
        %v492 = vlaneseq
        %v493 = vshrl.u32 %v492, 7
        %v494 = vsub.s32 %v491, %v493
        %v495 = vrot.slane %v488, %v494
        %v497 = vmul.f32 %v327, %v495
        %499 = vset.pattern.permute.xlu0 4
        %500 = vperm.xlu0 %499, %v453
        %v501 = vpop.permute.xlu0 %500
        %v503 = vunpack.c.l.s4 839922192
        %v504 = vunpack.c.0.s8 %v503
        %v505 = vlaneseq
        %v506 = vshrl.u32 %v505, 7
        %v507 = vsub.s32 %v504, %v506
        %v508 = vrot.slane %v501, %v507
        %v510 = vadd.f32 %v497, %v508
        %v512 = vcombine.high %v510, %v510
        %v514 = vmul.f32 %v340, %v510
        %v515 = vmul.f32 %v341, %v512
        %v516 = vadd.f32 %v483, %v514
        %v517 = vadd.f32 %v484, %v515
        %v520 = vcombine.low %v516, %v517
        %522 = vst [vmem:[%s321] sm:$0xff] %v520
        %s523 = sand.u32 %s154, 1
        %s524 = scalar_lea.sflag [#allocation4], %s523
        %s525 = sand.u32 %s154, 1
        %s526 = smul.addr %s525, 8
        %s527 = scalar_lea.vmem [#allocation8], %s526
        // Predicated region
        $region49: #{tpu_custom_call.1} parent=35 // pred_check
          %p528 = pneg %p164
        $region50: #{tpu_custom_call.1} parent=35 // pred_check_branch
          %530 = sbr.rel (%p528) target = $region52
        $region51: #{tpu_custom_call.1} parent=35 // pred_region
          %s532 = ssub.s32 128, 128
          %533 = vsyncadd %s524, %s532
          %s534 = smul.addr %s29, 2
          %s535 = smul.addr %s28, 2
          %s536 = sadd.s32 %s534, %s535
          %s537 = smul.addr %s536, 64
          %s538 = scalar_lea.hbm %s4, %s537
          %s540 = sshll.u32 %s527, 4
          %s541 = int_to_ptr.vmem [resolvable:$true] %s540
          %543 = dma.vmem_to_hbm [thread:$0]  %s541, 128, %s538, %s524
        $region52: #{tpu_custom_call.1} parent=35 // pred_fallthru
          _
      $region36: #{tpu_custom_call.1} parent=5 // pred_fallthru
        _
      %p544 = scmp.le.s32.totalorder 2, %s19
      // Predicated region
      $region53: #{tpu_custom_call.1} parent=5 // pred_check
        %p545 = pneg %p544
      $region54: #{tpu_custom_call.1} parent=5 // pred_check_branch
        %547 = sbr.rel (%p545) target = $region56
      $region55: #{tpu_custom_call.1} parent=5 // pred_region
        %s548 = ssub.s32 %s19, 2
        // Predicated region
        $region57: #{tpu_custom_call.1} parent=55 // pred_check
          %p549 = pneg %p170
        $region58: #{tpu_custom_call.1} parent=55 // pred_check_branch
          %551 = sbr.rel (%p549) target = $region60
        $region59: #{tpu_custom_call.1} parent=55 // pred_region
          %s552 = sand.u32 %s155, 1
          %s553 = scalar_lea.sflag [#allocation4], %s552
          %s554 = sand.u32 %s155, 1
          %s555 = smul.addr %s554, 8
          %s556 = scalar_lea.vmem [#allocation8], %s555
          %557 = dma.done %s553, 128
        $region60: #{tpu_custom_call.1} parent=55 // pred_fallthru
          _
      $region56: #{tpu_custom_call.1} parent=5 // pred_fallthru
        _
    $region6: #{tpu_custom_call.1} parent=1 // loop_footer
      %s23 = sadd.s32 1, %s19
    $region7: #{tpu_custom_call.1} parent=1 // loop_footer_branch
      %18 = sbr.rel target = $region3
    $region8: #{tpu_custom_call.1} parent=1 // loop_exit
      _
    %558 = vsyncpa [#allocation3], 1
    %s559 = scalar_lea.sflag [#allocation3], 1
    %560 = vsyncpa %s559, 1
    %561 = vsyncpa [#allocation6], 1
    %s562 = scalar_lea.sflag [#allocation6], 1
    %563 = vsyncpa %s562, 1
    %564 = vsyncpa [#allocation4], 1
    %s565 = scalar_lea.sflag [#allocation4], 1
    %566 = vsyncpa %s565, 1

</llo_original>
